<compile_context>
chip_gen: v6e
topology: v6e:2x2x1
jax: 0.10.0
libtpu: 0.0.40
codegen_flags: <defaults>
</compile_context>

<pallas_src>
import math

import jax
import jax.numpy as jnp
from jax import lax
from jax.experimental import pallas as pl
from jax.experimental.pallas import tpu as pltpu

# ---- model hyper-params (from Model.__init__) --------------------------------
SEQ_SIZE = 4
EMB_DIM = 32
POS_SIZE = 64
VOCAB_SIZE = 50
VOCAB_PAD = 128          # lane-dense padded vocab for the lm_head matmul/store
BATCH = 2                # power of two (the in-kernel mask uses & (B-1))


# ---- Pallas kernel: full forward pass ----------------------------------------
def gpt_kernel(text_ref, pos_ref, emb_ref, wqkv_ref, wo_ref, wh_ref, out_ref):
    # text_ref, pos_ref : SMEM (B, S) int32
    # emb_ref           : VMEM (VOCAB+POS, D) f32      -- [wte; wpe]
    # wqkv_ref          : VMEM (D+1, 3D) bf16          -- last row = fused biases
    # wo_ref            : VMEM (D+1, D)  bf16          -- last row = bias
    # wh_ref            : VMEM (S, D, VOCAB_PAD) bf16
    # out_ref           : VMEM (B, VOCAB_PAD) f32
    B, S = text_ref.shape
    D = EMB_DIM
    R = B * S                      # flattened rows, row i = s*B + b
    C = emb_ref.shape[0]           # VOCAB + POS

    # ---- fused embedding gather: two-hot selection matrix @ [wte; wpe] -------
    row_id = lax.broadcasted_iota(jnp.int32, (R, C), 0)
    col_id = lax.broadcasted_iota(jnp.int32, (R, C), 1)
    hit = jnp.zeros((R, C), jnp.bool_)
    for s in range(S):
        for b in range(B):
            i = s * B + b
            tok = text_ref[b, s]
            pos = pos_ref[b, s] + VOCAB_SIZE
            hit = hit | ((row_id == i) & ((col_id == tok) | (col_id == pos)))
    twohot = hit.astype(jnp.float32)
    h2 = jnp.dot(twohot, emb_ref[...],
                 preferred_element_type=jnp.float32)              # (R, D) f32

    ones_col = jnp.ones((R, 1), jnp.float32)

    # ---- fused QKV projection (biases folded as the last weight row) ---------
    h2_aug = jnp.concatenate([h2, ones_col], axis=1).astype(jnp.bfloat16)
    qkv = jnp.dot(h2_aug, wqkv_ref[...],
                  preferred_element_type=jnp.float32)             # (R, 3D) f32
    q = qkv[:, 0:D]
    k = qkv[:, D:2 * D]
    v = qkv[:, 2 * D:3 * D]

    # ---- single flattened (R, R) attention with block-diag causal mask -------
    scores = lax.dot_general(
        q.astype(jnp.bfloat16), k.astype(jnp.bfloat16),
        (((1,), (1,)), ((), ())),
        preferred_element_type=jnp.float32) * (1.0 / math.sqrt(D))  # (R, R)

    qi = lax.broadcasted_iota(jnp.int32, (R, R), 0)
    kj = lax.broadcasted_iota(jnp.int32, (R, R), 1)
    # rows are ordered i = s*B + b; for power-of-two B:
    #   same batch  <=> (i - j) % B == 0  <=> ((i - j) & (B-1)) == 0
    #   and, given same batch, causal (s_j <= s_i) <=> j <= i
    diff = qi - kj
    valid = ((diff & (B - 1)) == 0) & (kj <= qi)
    scores = jnp.where(valid, scores, -1e30)

    m = jnp.max(scores, axis=-1, keepdims=True)
    e = jnp.exp(scores - m)
    p = e * pl.reciprocal(jnp.sum(e, axis=-1, keepdims=True), approx=True)
    attn = jnp.dot(p.astype(jnp.bfloat16), v.astype(jnp.bfloat16),
                   preferred_element_type=jnp.float32)            # (R, D) f32

    # ---- output projection (bias folded) + residual --------------------------
    attn_aug = jnp.concatenate([attn, ones_col], axis=1).astype(jnp.bfloat16)
    o = jnp.dot(attn_aug, wo_ref[...], preferred_element_type=jnp.float32)
    h1 = h2 + o                                                   # (R, D) f32

    # ---- lm_head without the (B, S*D) relayout: accumulate over s ------------
    logits = jnp.zeros((B, VOCAB_PAD), jnp.float32)
    for s in range(S):
        h1_s = h1[s * B:(s + 1) * B, :].astype(jnp.bfloat16)      # (B, D)
        logits = logits + jnp.dot(h1_s, wh_ref[s],
                                  preferred_element_type=jnp.float32)

    # ---- mask padded vocab columns, log_softmax over vocab (dim=1) -----------
    vcol = lax.broadcasted_iota(jnp.int32, (B, VOCAB_PAD), 1)
    logits = jnp.where(vcol < VOCAB_SIZE, logits, -1e30)
    mx = jnp.max(logits, axis=-1, keepdims=True)
    lse = mx + jnp.log(jnp.sum(jnp.exp(logits - mx), axis=-1, keepdims=True))
    out_ref[...] = logits - lse


# ---- wrapper -------------------------------------------------------------------
@jax.jit
def gpt_forward(text, position, fused):
    B = text.shape[0]
    out = pl.pallas_call(
        gpt_kernel,
        out_shape=jax.ShapeDtypeStruct((B, VOCAB_PAD), jnp.float32),
        in_specs=[
            pl.BlockSpec(memory_space=pltpu.MemorySpace.SMEM),   # text
            pl.BlockSpec(memory_space=pltpu.MemorySpace.SMEM),   # position
            pl.BlockSpec(memory_space=pltpu.MemorySpace.VMEM),   # emb table
            pl.BlockSpec(memory_space=pltpu.MemorySpace.VMEM),   # wqkv (+bias)
            pl.BlockSpec(memory_space=pltpu.MemorySpace.VMEM),   # wo   (+bias)
            pl.BlockSpec(memory_space=pltpu.MemorySpace.VMEM),   # wh (S, D, Vpad)
        ],
        out_specs=pl.BlockSpec(memory_space=pltpu.MemorySpace.VMEM),
    )(text, position, fused['emb'], fused['wqkv'], fused['wo'], fused['wh'])
    return out[:, :VOCAB_SIZE]


# ---- parameters ----------------------------------------------------------------
def init_params(key):
    ks = jax.random.split(key, 8)
    s = 0.02
    d = EMB_DIM
    return {
        'wte': jax.random.normal(ks[0], (VOCAB_SIZE, d), jnp.float32) * s,
        'wpe': jax.random.normal(ks[1], (POS_SIZE, d), jnp.float32) * s,
        # attention projections, stored as (in, out); biases as (1, out)
        'wq': jax.random.normal(ks[2], (d, d), jnp.float32) / math.sqrt(d),
        'bq': jnp.zeros((1, d), jnp.float32),
        'wk': jax.random.normal(ks[3], (d, d), jnp.float32) / math.sqrt(d),
        'bk': jnp.zeros((1, d), jnp.float32),
        'wv': jax.random.normal(ks[4], (d, d), jnp.float32) / math.sqrt(d),
        'bv': jnp.zeros((1, d), jnp.float32),
        'wo': jax.random.normal(ks[5], (d, d), jnp.float32) / math.sqrt(d),
        'bo': jnp.zeros((1, d), jnp.float32),
        # lm_head: Linear(S*D -> V, bias=False), stored as (in, out)
        'wh': jax.random.normal(ks[6], (SEQ_SIZE * d, VOCAB_SIZE), jnp.float32)
              / math.sqrt(SEQ_SIZE * d),
    }


def fuse_params(p):
    """One-time packing of raw weights into the kernel layout (not in hot path)."""
    emb = jnp.concatenate([p['wte'], p['wpe']], axis=0).astype(jnp.float32)
    wqkv = jnp.concatenate([p['wq'], p['wk'], p['wv']], axis=1)        # (D, 3D)
    bqkv = jnp.concatenate([p['bq'], p['bk'], p['bv']], axis=1)        # (1, 3D)
    wqkv_aug = jnp.concatenate([wqkv, bqkv], axis=0).astype(jnp.bfloat16)
    wo_aug = jnp.concatenate([p['wo'], p['bo']], axis=0).astype(jnp.bfloat16)
    wh3 = p['wh'].reshape(SEQ_SIZE, EMB_DIM, VOCAB_SIZE)
    wh3 = jnp.pad(wh3, ((0, 0), (0, 0), (0, VOCAB_PAD - VOCAB_SIZE)))
    return {'emb': emb,
            'wqkv': wqkv_aug,
            'wo': wo_aug,
            'wh': wh3.astype(jnp.bfloat16)}


if __name__ == "__main__":
    key = jax.random.PRNGKey(0)
    pkey, tkey = jax.random.split(key)
    params = init_params(pkey)
    fused = fuse_params(params)

    text = jax.random.randint(tkey, (BATCH, SEQ_SIZE), 0, VOCAB_SIZE,
                              dtype=jnp.int32)
    position = jnp.tile(jnp.arange(SEQ_SIZE, dtype=jnp.int32), (BATCH, 1))

    logprobs = gpt_forward(text, position, fused)
    jax.block_until_ready(logprobs)

    assert logprobs.shape == (BATCH, VOCAB_SIZE)
    # log_softmax rows must sum to ~1 in prob space
    assert jnp.allclose(jnp.exp(logprobs).sum(axis=1), 1.0, atol=1e-4)
    print("KERNEL_OK")
</pallas_src>

<mosaic_0001>
module attributes {stable_mosaic.version = 11 : i64} {
  func.func @gpt_kernel(%arg0: memref<2x4xi32, #tpu.memory_space<smem>>, %arg1: memref<2x4xi32, #tpu.memory_space<smem>>, %arg2: memref<114x32xf32, #tpu.memory_space<vmem>>, %arg3: memref<33x96xbf16, #tpu.memory_space<vmem>>, %arg4: memref<33x32xbf16, #tpu.memory_space<vmem>>, %arg5: memref<4x32x128xbf16, #tpu.memory_space<vmem>>, %arg6: memref<2x128xf32, #tpu.memory_space<vmem>>) attributes {dimension_semantics = [], scalar_prefetch = 0 : i64, scratch_operands = 0 : i64, tpu.core_type = #tpu.core_type<tc>} {
    %0 = tpu.iota {dimensions = array<i32: 0>} : vector<8x114xi32>
    %1 = tpu.iota {dimensions = array<i32: 1>} : vector<8x114xi32>
    %false = arith.constant false
    %2 = vector.broadcast %false : i1 to vector<8x114xi1>
    %c0 = arith.constant 0 : index
    %c0_0 = arith.constant 0 : index
    %3 = memref.load %arg0[%c0, %c0_0] : memref<2x4xi32, #tpu.memory_space<smem>>
    %c0_1 = arith.constant 0 : index
    %c0_2 = arith.constant 0 : index
    %4 = memref.load %arg1[%c0_1, %c0_2] : memref<2x4xi32, #tpu.memory_space<smem>>
    %c50_i32 = arith.constant 50 : i32
    %5 = arith.addi %4, %c50_i32 : i32
    %c0_i32 = arith.constant 0 : i32
    %6 = vector.broadcast %c0_i32 : i32 to vector<8x114xi32>
    %7 = arith.cmpi eq, %0, %6 : vector<8x114xi32>
    %8 = vector.broadcast %3 : i32 to vector<8x114xi32>
    %9 = arith.cmpi eq, %1, %8 : vector<8x114xi32>
    %10 = vector.broadcast %5 : i32 to vector<8x114xi32>
    %11 = arith.cmpi eq, %1, %10 : vector<8x114xi32>
    %12 = arith.ori %9, %11 : vector<8x114xi1>
    %13 = arith.andi %7, %12 : vector<8x114xi1>
    %14 = arith.ori %2, %13 : vector<8x114xi1>
    %c1 = arith.constant 1 : index
    %c0_3 = arith.constant 0 : index
    %15 = memref.load %arg0[%c1, %c0_3] : memref<2x4xi32, #tpu.memory_space<smem>>
    %c1_4 = arith.constant 1 : index
    %c0_5 = arith.constant 0 : index
    %16 = memref.load %arg1[%c1_4, %c0_5] : memref<2x4xi32, #tpu.memory_space<smem>>
    %c50_i32_6 = arith.constant 50 : i32
    %17 = arith.addi %16, %c50_i32_6 : i32
    %c1_i32 = arith.constant 1 : i32
    %18 = vector.broadcast %c1_i32 : i32 to vector<8x114xi32>
    %19 = arith.cmpi eq, %0, %18 : vector<8x114xi32>
    %20 = vector.broadcast %15 : i32 to vector<8x114xi32>
    %21 = arith.cmpi eq, %1, %20 : vector<8x114xi32>
    %22 = vector.broadcast %17 : i32 to vector<8x114xi32>
    %23 = arith.cmpi eq, %1, %22 : vector<8x114xi32>
    %24 = arith.ori %21, %23 : vector<8x114xi1>
    %25 = arith.andi %19, %24 : vector<8x114xi1>
    %26 = arith.ori %14, %25 : vector<8x114xi1>
    %c0_7 = arith.constant 0 : index
    %c1_8 = arith.constant 1 : index
    %27 = memref.load %arg0[%c0_7, %c1_8] : memref<2x4xi32, #tpu.memory_space<smem>>
    %c0_9 = arith.constant 0 : index
    %c1_10 = arith.constant 1 : index
    %28 = memref.load %arg1[%c0_9, %c1_10] : memref<2x4xi32, #tpu.memory_space<smem>>
    %c50_i32_11 = arith.constant 50 : i32
    %29 = arith.addi %28, %c50_i32_11 : i32
    %c2_i32 = arith.constant 2 : i32
    %30 = vector.broadcast %c2_i32 : i32 to vector<8x114xi32>
    %31 = arith.cmpi eq, %0, %30 : vector<8x114xi32>
    %32 = vector.broadcast %27 : i32 to vector<8x114xi32>
    %33 = arith.cmpi eq, %1, %32 : vector<8x114xi32>
    %34 = vector.broadcast %29 : i32 to vector<8x114xi32>
    %35 = arith.cmpi eq, %1, %34 : vector<8x114xi32>
    %36 = arith.ori %33, %35 : vector<8x114xi1>
    %37 = arith.andi %31, %36 : vector<8x114xi1>
    %38 = arith.ori %26, %37 : vector<8x114xi1>
    %c1_12 = arith.constant 1 : index
    %c1_13 = arith.constant 1 : index
    %39 = memref.load %arg0[%c1_12, %c1_13] : memref<2x4xi32, #tpu.memory_space<smem>>
    %c1_14 = arith.constant 1 : index
    %c1_15 = arith.constant 1 : index
    %40 = memref.load %arg1[%c1_14, %c1_15] : memref<2x4xi32, #tpu.memory_space<smem>>
    %c50_i32_16 = arith.constant 50 : i32
    %41 = arith.addi %40, %c50_i32_16 : i32
    %c3_i32 = arith.constant 3 : i32
    %42 = vector.broadcast %c3_i32 : i32 to vector<8x114xi32>
    %43 = arith.cmpi eq, %0, %42 : vector<8x114xi32>
    %44 = vector.broadcast %39 : i32 to vector<8x114xi32>
    %45 = arith.cmpi eq, %1, %44 : vector<8x114xi32>
    %46 = vector.broadcast %41 : i32 to vector<8x114xi32>
    %47 = arith.cmpi eq, %1, %46 : vector<8x114xi32>
    %48 = arith.ori %45, %47 : vector<8x114xi1>
    %49 = arith.andi %43, %48 : vector<8x114xi1>
    %50 = arith.ori %38, %49 : vector<8x114xi1>
    %c0_17 = arith.constant 0 : index
    %c2 = arith.constant 2 : index
    %51 = memref.load %arg0[%c0_17, %c2] : memref<2x4xi32, #tpu.memory_space<smem>>
    %c0_18 = arith.constant 0 : index
    %c2_19 = arith.constant 2 : index
    %52 = memref.load %arg1[%c0_18, %c2_19] : memref<2x4xi32, #tpu.memory_space<smem>>
    %c50_i32_20 = arith.constant 50 : i32
    %53 = arith.addi %52, %c50_i32_20 : i32
    %c4_i32 = arith.constant 4 : i32
    %54 = vector.broadcast %c4_i32 : i32 to vector<8x114xi32>
    %55 = arith.cmpi eq, %0, %54 : vector<8x114xi32>
    %56 = vector.broadcast %51 : i32 to vector<8x114xi32>
    %57 = arith.cmpi eq, %1, %56 : vector<8x114xi32>
    %58 = vector.broadcast %53 : i32 to vector<8x114xi32>
    %59 = arith.cmpi eq, %1, %58 : vector<8x114xi32>
    %60 = arith.ori %57, %59 : vector<8x114xi1>
    %61 = arith.andi %55, %60 : vector<8x114xi1>
    %62 = arith.ori %50, %61 : vector<8x114xi1>
    %c1_21 = arith.constant 1 : index
    %c2_22 = arith.constant 2 : index
    %63 = memref.load %arg0[%c1_21, %c2_22] : memref<2x4xi32, #tpu.memory_space<smem>>
    %c1_23 = arith.constant 1 : index
    %c2_24 = arith.constant 2 : index
    %64 = memref.load %arg1[%c1_23, %c2_24] : memref<2x4xi32, #tpu.memory_space<smem>>
    %c50_i32_25 = arith.constant 50 : i32
    %65 = arith.addi %64, %c50_i32_25 : i32
    %c5_i32 = arith.constant 5 : i32
    %66 = vector.broadcast %c5_i32 : i32 to vector<8x114xi32>
    %67 = arith.cmpi eq, %0, %66 : vector<8x114xi32>
    %68 = vector.broadcast %63 : i32 to vector<8x114xi32>
    %69 = arith.cmpi eq, %1, %68 : vector<8x114xi32>
    %70 = vector.broadcast %65 : i32 to vector<8x114xi32>
    %71 = arith.cmpi eq, %1, %70 : vector<8x114xi32>
    %72 = arith.ori %69, %71 : vector<8x114xi1>
    %73 = arith.andi %67, %72 : vector<8x114xi1>
    %74 = arith.ori %62, %73 : vector<8x114xi1>
    %c0_26 = arith.constant 0 : index
    %c3 = arith.constant 3 : index
    %75 = memref.load %arg0[%c0_26, %c3] : memref<2x4xi32, #tpu.memory_space<smem>>
    %c0_27 = arith.constant 0 : index
    %c3_28 = arith.constant 3 : index
    %76 = memref.load %arg1[%c0_27, %c3_28] : memref<2x4xi32, #tpu.memory_space<smem>>
    %c50_i32_29 = arith.constant 50 : i32
    %77 = arith.addi %76, %c50_i32_29 : i32
    %c6_i32 = arith.constant 6 : i32
    %78 = vector.broadcast %c6_i32 : i32 to vector<8x114xi32>
    %79 = arith.cmpi eq, %0, %78 : vector<8x114xi32>
    %80 = vector.broadcast %75 : i32 to vector<8x114xi32>
    %81 = arith.cmpi eq, %1, %80 : vector<8x114xi32>
    %82 = vector.broadcast %77 : i32 to vector<8x114xi32>
    %83 = arith.cmpi eq, %1, %82 : vector<8x114xi32>
    %84 = arith.ori %81, %83 : vector<8x114xi1>
    %85 = arith.andi %79, %84 : vector<8x114xi1>
    %86 = arith.ori %74, %85 : vector<8x114xi1>
    %c1_30 = arith.constant 1 : index
    %c3_31 = arith.constant 3 : index
    %87 = memref.load %arg0[%c1_30, %c3_31] : memref<2x4xi32, #tpu.memory_space<smem>>
    %c1_32 = arith.constant 1 : index
    %c3_33 = arith.constant 3 : index
    %88 = memref.load %arg1[%c1_32, %c3_33] : memref<2x4xi32, #tpu.memory_space<smem>>
    %c50_i32_34 = arith.constant 50 : i32
    %89 = arith.addi %88, %c50_i32_34 : i32
    %c7_i32 = arith.constant 7 : i32
    %90 = vector.broadcast %c7_i32 : i32 to vector<8x114xi32>
    %91 = arith.cmpi eq, %0, %90 : vector<8x114xi32>
    %92 = vector.broadcast %87 : i32 to vector<8x114xi32>
    %93 = arith.cmpi eq, %1, %92 : vector<8x114xi32>
    %94 = vector.broadcast %89 : i32 to vector<8x114xi32>
    %95 = arith.cmpi eq, %1, %94 : vector<8x114xi32>
    %96 = arith.ori %93, %95 : vector<8x114xi1>
    %97 = arith.andi %91, %96 : vector<8x114xi1>
    %98 = arith.ori %86, %97 : vector<8x114xi1>
    %99 = arith.extui %98 : vector<8x114xi1> to vector<8x114xi32>
    %100 = arith.sitofp %99 : vector<8x114xi32> to vector<8x114xf32>
    %c0_35 = arith.constant 0 : index
    %c0_36 = arith.constant 0 : index
    %101 = vector.load %arg2[%c0_35, %c0_36] : memref<114x32xf32, #tpu.memory_space<vmem>>, vector<114x32xf32>
    %cst = arith.constant dense<0.000000e+00> : vector<8x32xf32>
    %102 = tpu.matmul %100, %101, %cst {dimension_numbers = #tpu.dot_dimension_numbers<[1], [0], [0], [1], [0, 0, 1, 1], [], []>} : vector<8x114xf32>, vector<114x32xf32>, vector<8x32xf32> -> vector<8x32xf32>
    %cst_37 = arith.constant 1.000000e+00 : f32
    %103 = vector.broadcast %cst_37 : f32 to vector<8x1xf32>
    %104 = tpu.concatenate %102, %103 in 1 : vector<8x32xf32>, vector<8x1xf32> -> vector<8x33xf32>
    %105 = arith.truncf %104 : vector<8x33xf32> to vector<8x33xbf16>
    %c0_38 = arith.constant 0 : index
    %c0_39 = arith.constant 0 : index
    %106 = vector.load %arg3[%c0_38, %c0_39] : memref<33x96xbf16, #tpu.memory_space<vmem>>, vector<33x96xbf16>
    %cst_40 = arith.constant dense<0.000000e+00> : vector<8x96xf32>
    %107 = tpu.matmul %105, %106, %cst_40 {dimension_numbers = #tpu.dot_dimension_numbers<[1], [0], [0], [1], [0, 0, 1, 1], [], []>} : vector<8x33xbf16>, vector<33x96xbf16>, vector<8x96xf32> -> vector<8x96xf32>
    %108 = vector.extract_strided_slice %107 {offsets = [0, 0], sizes = [8, 32], strides = [1, 1]} : vector<8x96xf32> to vector<8x32xf32>
    %109 = vector.extract_strided_slice %107 {offsets = [0, 32], sizes = [8, 32], strides = [1, 1]} : vector<8x96xf32> to vector<8x32xf32>
    %110 = vector.extract_strided_slice %107 {offsets = [0, 64], sizes = [8, 32], strides = [1, 1]} : vector<8x96xf32> to vector<8x32xf32>
    %111 = arith.truncf %108 : vector<8x32xf32> to vector<8x32xbf16>
    %112 = arith.truncf %109 : vector<8x32xf32> to vector<8x32xbf16>
    %cst_41 = arith.constant dense<0.000000e+00> : vector<8x8xf32>
    %113 = tpu.matmul %111, %112, %cst_41 {dimension_numbers = #tpu.dot_dimension_numbers<[1], [1], [0], [0], [0, 0, 1, 0], [], []>} : vector<8x32xbf16>, vector<8x32xbf16>, vector<8x8xf32> -> vector<8x8xf32>
    %cst_42 = arith.constant 0.176776692 : f32
    %114 = vector.broadcast %cst_42 : f32 to vector<8x8xf32>
    %115 = arith.mulf %113, %114 : vector<8x8xf32>
    %116 = tpu.iota {dimensions = array<i32: 0>} : vector<8x8xi32>
    %117 = tpu.iota {dimensions = array<i32: 1>} : vector<8x8xi32>
    %118 = arith.subi %116, %117 : vector<8x8xi32>
    %c1_i32_43 = arith.constant 1 : i32
    %119 = vector.broadcast %c1_i32_43 : i32 to vector<8x8xi32>
    %120 = arith.andi %118, %119 : vector<8x8xi32>
    %c0_i32_44 = arith.constant 0 : i32
    %121 = vector.broadcast %c0_i32_44 : i32 to vector<8x8xi32>
    %122 = arith.cmpi eq, %120, %121 : vector<8x8xi32>
    %123 = arith.cmpi sle, %117, %116 : vector<8x8xi32>
    %124 = arith.andi %122, %123 : vector<8x8xi1>
    %cst_45 = arith.constant -1.000000e+30 : f32
    %125 = vector.broadcast %cst_45 : f32 to vector<8x8xf32>
    %126 = arith.select %124, %115, %125 : vector<8x8xi1>, vector<8x8xf32>
    %cst_46 = arith.constant dense<0xFF800000> : vector<8xf32>
    %127 = vector.multi_reduction <maximumf>, %126, %cst_46 [1] : vector<8x8xf32> to vector<8xf32>
    %128 = vector.shape_cast %127 : vector<8xf32> to vector<8x1xf32>
    %129 = vector.broadcast %128 : vector<8x1xf32> to vector<8x8xf32>
    %130 = arith.subf %126, %129 : vector<8x8xf32>
    %131 = math.exp %130 : vector<8x8xf32>
    %cst_47 = arith.constant dense<0.000000e+00> : vector<8xf32>
    %132 = vector.multi_reduction <add>, %131, %cst_47 [1] : vector<8x8xf32> to vector<8xf32>
    %133 = vector.shape_cast %132 : vector<8xf32> to vector<8x1xf32>
    %134 = tpu.reciprocal %133 {approx = true} : vector<8x1xf32> -> vector<8x1xf32>
    %135 = vector.broadcast %134 : vector<8x1xf32> to vector<8x8xf32>
    %136 = arith.mulf %131, %135 : vector<8x8xf32>
    %137 = arith.truncf %136 : vector<8x8xf32> to vector<8x8xbf16>
    %138 = arith.truncf %110 : vector<8x32xf32> to vector<8x32xbf16>
    %cst_48 = arith.constant dense<0.000000e+00> : vector<8x32xf32>
    %139 = tpu.matmul %137, %138, %cst_48 {dimension_numbers = #tpu.dot_dimension_numbers<[1], [0], [0], [1], [0, 0, 1, 1], [], []>} : vector<8x8xbf16>, vector<8x32xbf16>, vector<8x32xf32> -> vector<8x32xf32>
    %140 = tpu.concatenate %139, %103 in 1 : vector<8x32xf32>, vector<8x1xf32> -> vector<8x33xf32>
    %141 = arith.truncf %140 : vector<8x33xf32> to vector<8x33xbf16>
    %c0_49 = arith.constant 0 : index
    %c0_50 = arith.constant 0 : index
    %142 = vector.load %arg4[%c0_49, %c0_50] : memref<33x32xbf16, #tpu.memory_space<vmem>>, vector<33x32xbf16>
    %cst_51 = arith.constant dense<0.000000e+00> : vector<8x32xf32>
    %143 = tpu.matmul %141, %142, %cst_51 {dimension_numbers = #tpu.dot_dimension_numbers<[1], [0], [0], [1], [0, 0, 1, 1], [], []>} : vector<8x33xbf16>, vector<33x32xbf16>, vector<8x32xf32> -> vector<8x32xf32>
    %144 = arith.addf %102, %143 : vector<8x32xf32>
    %cst_52 = arith.constant 0.000000e+00 : f32
    %145 = vector.broadcast %cst_52 : f32 to vector<2x128xf32>
    %146 = vector.extract_strided_slice %144 {offsets = [0, 0], sizes = [2, 32], strides = [1, 1]} : vector<8x32xf32> to vector<2x32xf32>
    %147 = arith.truncf %146 : vector<2x32xf32> to vector<2x32xbf16>
    %c0_53 = arith.constant 0 : index
    %c0_54 = arith.constant 0 : index
    %c0_55 = arith.constant 0 : index
    %148 = vector.load %arg5[%c0_53, %c0_54, %c0_55] : memref<4x32x128xbf16, #tpu.memory_space<vmem>>, vector<1x32x128xbf16>
    %149 = vector.shape_cast %148 : vector<1x32x128xbf16> to vector<32x128xbf16>
    %cst_56 = arith.constant dense<0.000000e+00> : vector<2x128xf32>
    %150 = tpu.matmul %147, %149, %cst_56 {dimension_numbers = #tpu.dot_dimension_numbers<[1], [0], [0], [1], [0, 0, 1, 1], [], []>} : vector<2x32xbf16>, vector<32x128xbf16>, vector<2x128xf32> -> vector<2x128xf32>
    %151 = arith.addf %145, %150 : vector<2x128xf32>
    %152 = vector.extract_strided_slice %144 {offsets = [2, 0], sizes = [2, 32], strides = [1, 1]} : vector<8x32xf32> to vector<2x32xf32>
    %153 = arith.truncf %152 : vector<2x32xf32> to vector<2x32xbf16>
    %c1_57 = arith.constant 1 : index
    %c0_58 = arith.constant 0 : index
    %c0_59 = arith.constant 0 : index
    %154 = vector.load %arg5[%c1_57, %c0_58, %c0_59] : memref<4x32x128xbf16, #tpu.memory_space<vmem>>, vector<1x32x128xbf16>
    %155 = vector.shape_cast %154 : vector<1x32x128xbf16> to vector<32x128xbf16>
    %cst_60 = arith.constant dense<0.000000e+00> : vector<2x128xf32>
    %156 = tpu.matmul %153, %155, %cst_60 {dimension_numbers = #tpu.dot_dimension_numbers<[1], [0], [0], [1], [0, 0, 1, 1], [], []>} : vector<2x32xbf16>, vector<32x128xbf16>, vector<2x128xf32> -> vector<2x128xf32>
    %157 = arith.addf %151, %156 : vector<2x128xf32>
    %158 = vector.extract_strided_slice %144 {offsets = [4, 0], sizes = [2, 32], strides = [1, 1]} : vector<8x32xf32> to vector<2x32xf32>
    %159 = arith.truncf %158 : vector<2x32xf32> to vector<2x32xbf16>
    %c2_61 = arith.constant 2 : index
    %c0_62 = arith.constant 0 : index
    %c0_63 = arith.constant 0 : index
    %160 = vector.load %arg5[%c2_61, %c0_62, %c0_63] : memref<4x32x128xbf16, #tpu.memory_space<vmem>>, vector<1x32x128xbf16>
    %161 = vector.shape_cast %160 : vector<1x32x128xbf16> to vector<32x128xbf16>
    %cst_64 = arith.constant dense<0.000000e+00> : vector<2x128xf32>
    %162 = tpu.matmul %159, %161, %cst_64 {dimension_numbers = #tpu.dot_dimension_numbers<[1], [0], [0], [1], [0, 0, 1, 1], [], []>} : vector<2x32xbf16>, vector<32x128xbf16>, vector<2x128xf32> -> vector<2x128xf32>
    %163 = arith.addf %157, %162 : vector<2x128xf32>
    %164 = vector.extract_strided_slice %144 {offsets = [6, 0], sizes = [2, 32], strides = [1, 1]} : vector<8x32xf32> to vector<2x32xf32>
    %165 = arith.truncf %164 : vector<2x32xf32> to vector<2x32xbf16>
    %c3_65 = arith.constant 3 : index
    %c0_66 = arith.constant 0 : index
    %c0_67 = arith.constant 0 : index
    %166 = vector.load %arg5[%c3_65, %c0_66, %c0_67] : memref<4x32x128xbf16, #tpu.memory_space<vmem>>, vector<1x32x128xbf16>
    %167 = vector.shape_cast %166 : vector<1x32x128xbf16> to vector<32x128xbf16>
    %cst_68 = arith.constant dense<0.000000e+00> : vector<2x128xf32>
    %168 = tpu.matmul %165, %167, %cst_68 {dimension_numbers = #tpu.dot_dimension_numbers<[1], [0], [0], [1], [0, 0, 1, 1], [], []>} : vector<2x32xbf16>, vector<32x128xbf16>, vector<2x128xf32> -> vector<2x128xf32>
    %169 = arith.addf %163, %168 : vector<2x128xf32>
    %170 = tpu.iota {dimensions = array<i32: 1>} : vector<2x128xi32>
    %c50_i32_69 = arith.constant 50 : i32
    %171 = vector.broadcast %c50_i32_69 : i32 to vector<2x128xi32>
    %172 = arith.cmpi slt, %170, %171 : vector<2x128xi32>
    %cst_70 = arith.constant -1.000000e+30 : f32
    %173 = vector.broadcast %cst_70 : f32 to vector<2x128xf32>
    %174 = arith.select %172, %169, %173 : vector<2x128xi1>, vector<2x128xf32>
    %cst_71 = arith.constant dense<0xFF800000> : vector<2xf32>
    %175 = vector.multi_reduction <maximumf>, %174, %cst_71 [1] : vector<2x128xf32> to vector<2xf32>
    %176 = vector.shape_cast %175 : vector<2xf32> to vector<2x1xf32>
    %177 = vector.broadcast %176 : vector<2x1xf32> to vector<2x128xf32>
    %178 = arith.subf %174, %177 : vector<2x128xf32>
    %179 = math.exp %178 : vector<2x128xf32>
    %cst_72 = arith.constant dense<0.000000e+00> : vector<2xf32>
    %180 = vector.multi_reduction <add>, %179, %cst_72 [1] : vector<2x128xf32> to vector<2xf32>
    %181 = vector.shape_cast %180 : vector<2xf32> to vector<2x1xf32>
    %182 = math.log %181 : vector<2x1xf32>
    %183 = arith.addf %176, %182 : vector<2x1xf32>
    %184 = vector.broadcast %183 : vector<2x1xf32> to vector<2x128xf32>
    %185 = arith.subf %174, %184 : vector<2x128xf32>
    %c0_73 = arith.constant 0 : index
    %c0_74 = arith.constant 0 : index
    %186 = vector.load %arg6[%c0_73, %c0_74] : memref<2x128xf32, #tpu.memory_space<vmem>>, vector<2x128xf32>
    tpu.vector_store %arg6[%c0_73, %c0_74], %185 {strides = array<i32>} : memref<2x128xf32, #tpu.memory_space<vmem>>, vector<2x128xf32>,
    return
  }
}

</mosaic_0001>

<llo_original>
// kernel: gpt_forward.1
$region0: #{gpt_forward.1}
  #allocation0 [shape = 'u32[]', space=smem, size = 0x4, offset = 0x4, fixed_abs, tag = 'smem constant byte address 0x4 - core index']
  #allocation1 [shape = 'u32[144,128]{1,0:T(1,128)}', space=vmem, size = 0x12000, scoped, tag = 'internal scratch']
  %s0 = inlined_call_operand.vmem [shape: s32[2,4], index: 0, kind: input, shape index: {}]
  %s1 = inlined_call_operand.vmem [shape: s32[2,4], index: 1, kind: input, shape index: {}]
  %s2 = inlined_call_operand.vmem [shape: f32[114,32], index: 2, kind: input, shape index: {}]
  %s3 = inlined_call_operand.vmem [shape: bf16[33,96], index: 3, kind: input, shape index: {}]
  %s4 = inlined_call_operand.vmem [shape: bf16[33,32], index: 4, kind: input, shape index: {}]
  %s5 = inlined_call_operand.vmem [shape: bf16[4,32,128], index: 5, kind: input, shape index: {}]
  %s6 = inlined_call_operand.hbm [shape: f32[2,128], index: 6, kind: output, shape index: {}]
  %s7 = sld [smem:[#allocation0]]
  $region42: #{gpt_forward.1} parent=0
    _
  %s9 = ssub.s32 1, %s7
  %s10 = scalar_select 0, %s9, %s7
  $region1: #{gpt_forward.1} parent=0
    #allocation2 [shape = 'u8[1024]{0}', space=smem, size = 0x400, scoped, tag = 'input window, operand 0, single buffered']
    #allocation3 [shape = 's32[1]{0}', space=sflag, size = 0x4, scoped, tag = 'scoped memory for gpt_forward.1']
    #allocation4 [shape = 's32[1]{0}', space=sflag, size = 0x4, scoped, tag = 'scoped memory for gpt_forward.1']
    #allocation5 [shape = 'u8[1024]{0}', space=smem, size = 0x400, scoped, tag = 'input window, operand 1, single buffered']
    #allocation6 [shape = 's32[1]{0}', space=sflag, size = 0x4, scoped, tag = 'scoped memory for gpt_forward.1']
    #allocation7 [shape = 'u8[1024]{0}', space=vmem, size = 0x400, scoped, tag = 'output window, operand 0, single buffered']
    %11 = vsyncpa [#allocation4], 0
    %12 = vsyncpa [#allocation6], 0
    %13 = vsyncpa [#allocation3], 0
    // Predicated region
    $region2: #{gpt_forward.1} parent=1 // pred_check
      _
    $region3: #{gpt_forward.1} parent=1 // pred_check_branch
      %15 = sbr.rel (0) target = $region5
    $region4: #{gpt_forward.1} parent=1 // pred_region
      %s17 = ssub.s32 32, 32
      %18 = vsyncadd [#allocation4], %s17
      %s20 = sshll.u32 %s0, 4
      %s21 = int_to_ptr.vmem [resolvable:$true] %s20
      %23 = dma.vmem_to_smem %s21, 32, [#allocation2], [#allocation4]
    $region5: #{gpt_forward.1} parent=1 // pred_fallthru
      _
    // Predicated region
    $region6: #{gpt_forward.1} parent=1 // pred_check
      _
    $region7: #{gpt_forward.1} parent=1 // pred_check_branch
      %25 = sbr.rel (0) target = $region9
    $region8: #{gpt_forward.1} parent=1 // pred_region
      %s27 = ssub.s32 32, 32
      %28 = vsyncadd [#allocation6], %s27
      %s30 = sshll.u32 %s1, 4
      %s31 = int_to_ptr.vmem [resolvable:$true] %s30
      %33 = dma.vmem_to_smem %s31, 32, [#allocation5], [#allocation6]
    $region9: #{gpt_forward.1} parent=1 // pred_fallthru
      _
    // Predicated region
    $region10: #{gpt_forward.1} parent=1 // pred_check
      _
    $region11: #{gpt_forward.1} parent=1 // pred_check_branch
      %35 = sbr.rel (0) target = $region13
    $region12: #{gpt_forward.1} parent=1 // pred_region
      _
    $region13: #{gpt_forward.1} parent=1 // pred_fallthru
      _
    // Predicated region
    $region14: #{gpt_forward.1} parent=1 // pred_check
      _
    $region15: #{gpt_forward.1} parent=1 // pred_check_branch
      %37 = sbr.rel (0) target = $region17
    $region16: #{gpt_forward.1} parent=1 // pred_region
      _
    $region17: #{gpt_forward.1} parent=1 // pred_fallthru
      _
    // Predicated region
    $region18: #{gpt_forward.1} parent=1 // pred_check
      _
    $region19: #{gpt_forward.1} parent=1 // pred_check_branch
      %39 = sbr.rel (0) target = $region21
    $region20: #{gpt_forward.1} parent=1 // pred_region
      _
    $region21: #{gpt_forward.1} parent=1 // pred_fallthru
      _
    // Predicated region
    $region22: #{gpt_forward.1} parent=1 // pred_check
      _
    $region23: #{gpt_forward.1} parent=1 // pred_check_branch
      %41 = sbr.rel (0) target = $region25
    $region24: #{gpt_forward.1} parent=1 // pred_region
      _
    $region25: #{gpt_forward.1} parent=1 // pred_fallthru
      _
    // Predicated region
    $region26: #{gpt_forward.1} parent=1 // pred_check
      _
    $region27: #{gpt_forward.1} parent=1 // pred_check_branch
      %43 = sbr.rel (0) target = $region29
    $region28: #{gpt_forward.1} parent=1 // pred_region
      %44 = dma.done [#allocation4], 32
    $region29: #{gpt_forward.1} parent=1 // pred_fallthru
      _
    // Predicated region
    $region30: #{gpt_forward.1} parent=1 // pred_check
      _
    $region31: #{gpt_forward.1} parent=1 // pred_check_branch
      %46 = sbr.rel (0) target = $region33
    $region32: #{gpt_forward.1} parent=1 // pred_region
      %47 = dma.done [#allocation6], 32
    $region33: #{gpt_forward.1} parent=1 // pred_fallthru
      _
    %48 = sfence
    %v50 = vlaneseq
    %v51 = vshrl.u32 %v50, 7
    %v52 = vlaneseq
    %v53 = vand.u32 %v52, 127
    %s54 = sld [smem:[#allocation2]]
    %s55 = sld [smem:[#allocation5]]
    %s56 = sadd.s32 %s55, 50
    %vm57 = vcmp.eq.s32.totalorder %v51, 0
    %v58 = vstv %s54
    %vm59 = vcmp.eq.s32.totalorder %v53, %v58
    %v60 = vstv %s56
    %vm61 = vcmp.eq.s32.totalorder %v53, %v60
    %vm62 = vmor %vm59, %vm61
    %vm63 = vmand %vm57, %vm62
    %s64 = sld [smem:[#allocation2 + $0x80]]
    %s65 = sld [smem:[#allocation5 + $0x80]]
    %s66 = sadd.s32 %s65, 50
    %vm67 = vcmp.eq.s32.totalorder %v51, 1
    %v68 = vstv %s64
    %vm69 = vcmp.eq.s32.totalorder %v53, %v68
    %v70 = vstv %s66
    %vm71 = vcmp.eq.s32.totalorder %v53, %v70
    %vm72 = vmor %vm69, %vm71
    %vm73 = vmand %vm67, %vm72
    %vm74 = vmor %vm63, %vm73
    %s75 = sld [smem:[#allocation2 + $0x1]]
    %s76 = sld [smem:[#allocation5 + $0x1]]
    %s77 = sadd.s32 %s76, 50
    %vm78 = vcmp.eq.s32.totalorder %v51, 2
    %v79 = vstv %s75
    %vm80 = vcmp.eq.s32.totalorder %v53, %v79
    %v81 = vstv %s77
    %vm82 = vcmp.eq.s32.totalorder %v53, %v81
    %vm83 = vmor %vm80, %vm82
    %vm84 = vmand %vm78, %vm83
    %vm85 = vmor %vm74, %vm84
    %s86 = sld [smem:[#allocation2 + $0x81]]
    %s87 = sld [smem:[#allocation5 + $0x81]]
    %s88 = sadd.s32 %s87, 50
    %vm89 = vcmp.eq.s32.totalorder %v51, 3
    %v90 = vstv %s86
    %vm91 = vcmp.eq.s32.totalorder %v53, %v90
    %v92 = vstv %s88
    %vm93 = vcmp.eq.s32.totalorder %v53, %v92
    %vm94 = vmor %vm91, %vm93
    %vm95 = vmand %vm89, %vm94
    %vm96 = vmor %vm85, %vm95
    %s97 = sld [smem:[#allocation2 + $0x2]]
    %s98 = sld [smem:[#allocation5 + $0x2]]
    %s99 = sadd.s32 %s98, 50
    %vm100 = vcmp.eq.s32.totalorder %v51, 4
    %v101 = vstv %s97
    %vm102 = vcmp.eq.s32.totalorder %v53, %v101
    %v103 = vstv %s99
    %vm104 = vcmp.eq.s32.totalorder %v53, %v103
    %vm105 = vmor %vm102, %vm104
    %vm106 = vmand %vm100, %vm105
    %vm107 = vmor %vm96, %vm106
    %s108 = sld [smem:[#allocation2 + $0x82]]
    %s109 = sld [smem:[#allocation5 + $0x82]]
    %s110 = sadd.s32 %s109, 50
    %vm111 = vcmp.eq.s32.totalorder %v51, 5
    %v112 = vstv %s108
    %vm113 = vcmp.eq.s32.totalorder %v53, %v112
    %v114 = vstv %s110
    %vm115 = vcmp.eq.s32.totalorder %v53, %v114
    %vm116 = vmor %vm113, %vm115
    %vm117 = vmand %vm111, %vm116
    %vm118 = vmor %vm107, %vm117
    %s119 = sld [smem:[#allocation2 + $0x3]]
    %s120 = sld [smem:[#allocation5 + $0x3]]
    %s121 = sadd.s32 %s120, 50
    %vm122 = vcmp.eq.s32.totalorder %v51, 6
    %v123 = vstv %s119
    %vm124 = vcmp.eq.s32.totalorder %v53, %v123
    %v125 = vstv %s121
    %vm126 = vcmp.eq.s32.totalorder %v53, %v125
    %vm127 = vmor %vm124, %vm126
    %vm128 = vmand %vm122, %vm127
    %vm129 = vmor %vm118, %vm128
    %s130 = sld [smem:[#allocation2 + $0x83]]
    %s131 = sld [smem:[#allocation5 + $0x83]]
    %s132 = sadd.s32 %s131, 50
    %vm133 = vcmp.eq.s32.totalorder %v51, 7
    %v134 = vstv %s130
    %vm135 = vcmp.eq.s32.totalorder %v53, %v134
    %v136 = vstv %s132
    %vm137 = vcmp.eq.s32.totalorder %v53, %v136
    %vm138 = vmor %vm135, %vm137
    %vm139 = vmand %vm133, %vm138
    %vm140 = vmor %vm129, %vm139
    %v141 = vsel %vm140, 1, 0
    %v142 = vcvt.s32.f32 %v141
    %v143 = vld [vmem:[%s2] sm:$0xff]
    %v144 = vld [vmem:[%s2 + $0x8] sm:$0xff]
    %v145 = vld [vmem:[%s2 + $0x10] sm:$0xff]
    %v146 = vld [vmem:[%s2 + $0x18] sm:$0xff]
    %v147 = vld [vmem:[%s2 + $0x20] sm:$0xff]
    %v148 = vld [vmem:[%s2 + $0x28] sm:$0xff]
    %v149 = vld [vmem:[%s2 + $0x30] sm:$0xff]
    %v150 = vld [vmem:[%s2 + $0x38] sm:$0xff]
    %v151 = vld [vmem:[%s2 + $0x40] sm:$0xff]
    %v152 = vld [vmem:[%s2 + $0x48] sm:$0xff]
    %v153 = vld [vmem:[%s2 + $0x50] sm:$0xff]
    %v154 = vld [vmem:[%s2 + $0x58] sm:$0xff]
    %v155 = vld [vmem:[%s2 + $0x60] sm:$0xff]
    %v156 = vld [vmem:[%s2 + $0x68] sm:$0xff]
    %v157 = vld [vmem:[%s2 + $0x70] sm:$0x3]
    %vm158 = vcmask 932864
    %v160 = vsel %vm158, %v142, 0
    %vm162 = vcmask 1041408
    %v164 = vsel %vm162, %v157, 0
    %166 = vmatprep.subr.mxu0 0.0
    %167 = vmatpush1.msra.mxu0 0.0
    %168 = vmatprep.subr.mxu0 0.0
    %169 = vmatpush1.msra.mxu0 %v164
    %170 = vmatprep.subr.mxu0 0.0
    %171 = vmatpush1.msra.mxu0 %v156
    %172 = vmatprep.subr.mxu0 0.0
    %173 = vmatpush1.msra.mxu0 %v155
    %174 = vmatprep.subr.mxu0 0.0
    %175 = vmatpush1.msra.mxu0 %v154
    %176 = vmatprep.subr.mxu0 0.0
    %177 = vmatpush1.msra.mxu0 %v153
    %178 = vmatprep.subr.mxu0 0.0
    %179 = vmatpush1.msra.mxu0 %v152
    %180 = vmatprep.subr.mxu0 0.0
    %181 = vmatpush1.msra.mxu0 %v151
    %182 = vmatprep.subr.mxu0 0.0
    %183 = vmatpush1.msra.mxu0 %v150
    %184 = vmatprep.subr.mxu0 0.0
    %185 = vmatpush1.msra.mxu0 %v149
    %186 = vmatprep.subr.mxu0 0.0
    %187 = vmatpush1.msra.mxu0 %v148
    %188 = vmatprep.subr.mxu0 0.0
    %189 = vmatpush1.msra.mxu0 %v147
    %190 = vmatprep.subr.mxu0 0.0
    %191 = vmatpush1.msra.mxu0 %v146
    %192 = vmatprep.subr.mxu0 0.0
    %193 = vmatpush1.msra.mxu0 %v145
    %194 = vmatprep.subr.mxu0 0.0
    %195 = vmatpush1.msra.mxu0 %v144
    %196 = vmatprep.subr.mxu0 0.0
    %197 = vmatpush1.msra.mxu0 %v143
    %198 = vmatprep.subr.mxu0 0.0
    %199 = vmatpush2.msra.mxu0 0.0
    %200 = vmatprep.subr.mxu0 0.0
    %201 = vmatpush2.msra.mxu0 0.0
    %202 = vmatprep.subr.mxu0 0.0
    %203 = vmatpush2.msra.mxu0 0.0
    %204 = vmatprep.subr.mxu0 0.0
    %205 = vmatpush2.msra.mxu0 0.0
    %206 = vmatprep.subr.mxu0 0.0
    %207 = vmatpush2.msra.mxu0 0.0
    %208 = vmatprep.subr.mxu0 0.0
    %209 = vmatpush2.msra.mxu0 0.0
    %210 = vmatprep.subr.mxu0 0.0
    %211 = vmatpush2.msra.mxu0 0.0
    %212 = vmatprep.subr.mxu0 0.0
    %213 = vmatpush2.msra.mxu0 0.0
    %214 = vmatprep.subr.mxu0 0.0
    %215 = vmatpush2.msra.mxu0 0.0
    %216 = vmatprep.subr.mxu0 0.0
    %217 = vmatpush2.msra.mxu0 0.0
    %218 = vmatprep.subr.mxu0 0.0
    %219 = vmatpush2.msra.mxu0 0.0
    %220 = vmatprep.subr.mxu0 0.0
    %221 = vmatpush2.msra.mxu0 0.0
    %222 = vmatprep.subr.mxu0 0.0
    %223 = vmatpush2.msra.mxu0 0.0
    %224 = vmatprep.subr.mxu0 0.0
    %225 = vmatpush2.msra.mxu0 0.0
    %226 = vmatprep.subr.mxu0 0.0
    %227 = vmatpush2.msra.mxu0 0.0
    %228 = vmatprep.subr.mxu0 0.0
    %229 = vmatpush2.msra.mxu0 0.0
    %230 = vmatprep.mubr.f32.mxu0 0.0
    %231 = vmatmul.mubr.f32.gmra.mxu0 %v160
    %v232 = vpop.f32.mrf.mxu0
    %v233 = vadd.f32 0.0, %v232
    %v234 = vpop.f32.mrf.mxu0
    %235 = vdwg.mxu0
    %vm236 = vcmask 261120
    %v237 = vsel %vm236, %v233, 1.0
    %v238 = vpack.c.bf16 %v237, %v237
    %v239 = vld [vmem:[%s3] sm:$0xf]
    %v240 = vld [vmem:[%s3 + $0x4] sm:$0xf]
    %v241 = vld [vmem:[%s3 + $0x8] sm:$0xf]
    %v242 = vld [vmem:[%s3 + $0xc] sm:$0xf]
    %v243 = vld [vmem:[%s3 + $0x10] sm:$0x1]
    %v249 = vunpack.c.l.b16 %v239
    %v250 = vunpack.c.l.b16 %v240
    %v251 = vunpack.c.l.b16 %v241
    %v252 = vunpack.c.l.b16 %v242
    %v253 = vunpack.c.l.b16 %v243
    %v254 = vpack.c.b16 %v250, %v249
    %v255 = vpack.c.b16 %v252, %v251
    %v256 = vpack.c.b16 %v253, %v253
    %vm259 = vcmask 269312
    %v261 = vsel %vm259, %v238, 0
    %vm263 = vcmask 1040384
    %v264 = vsel 0, 4294967295, 65535
    %v265 = vsel %vm263, %v264, 0
    %v267 = vand.u32 %v256, %v265
    %269 = vmatprep.subr.bf16.mxu0 0
    %270 = vmatpush1.bf16.msra.mxu0 0
    %271 = vmatprep.subr.bf16.mxu0 0
    %272 = vmatpush1.bf16.msra.mxu0 0
    %273 = vmatprep.subr.bf16.mxu0 0
    %274 = vmatpush1.bf16.msra.mxu0 0
    %275 = vmatprep.subr.bf16.mxu0 0
    %276 = vmatpush1.bf16.msra.mxu0 0
    %277 = vmatprep.subr.bf16.mxu0 0
    %278 = vmatpush1.bf16.msra.mxu0 0
    %279 = vmatprep.subr.bf16.mxu0 0
    %280 = vmatpush1.bf16.msra.mxu0 %v267
    %281 = vmatprep.subr.bf16.mxu0 0
    %282 = vmatpush1.bf16.msra.mxu0 %v255
    %283 = vmatprep.subr.bf16.mxu0 0
    %284 = vmatpush1.bf16.msra.mxu0 %v254
    %285 = vmatprep.subr.bf16.mxu0 0
    %286 = vmatpush2.bf16.msra.mxu0 0
    %287 = vmatprep.subr.bf16.mxu0 0
    %288 = vmatpush2.bf16.msra.mxu0 0
    %289 = vmatprep.subr.bf16.mxu0 0
    %290 = vmatpush2.bf16.msra.mxu0 0
    %291 = vmatprep.subr.bf16.mxu0 0
    %292 = vmatpush2.bf16.msra.mxu0 0
    %293 = vmatprep.subr.bf16.mxu0 0
    %294 = vmatpush2.bf16.msra.mxu0 0
    %295 = vmatprep.subr.bf16.mxu0 0
    %296 = vmatpush2.bf16.msra.mxu0 0
    %297 = vmatprep.subr.bf16.mxu0 0
    %298 = vmatpush2.bf16.msra.mxu0 0
    %299 = vmatprep.subr.bf16.mxu0 0
    %300 = vmatpush2.bf16.msra.mxu0 0
    %301 = vmatprep.mubr.bf16.mxu0 0
    %302 = vmatmul.mubr.bf16.gmra.mxu0 %v261
    %v303 = vpop.f32.mrf.mxu0
    %v304 = vadd.f32 0.0, %v303
    %v305 = vpop.f32.mrf.mxu0
    %v306 = vpop.f32.mrf.mxu0
    %v307 = vpop.f32.mrf.mxu0
    %308 = vdwg.mxu0
    %v309 = vpack.c.bf16 %v304, %v304
    %311 = vrot.lane.b32.xlu0 %v309, 96
    %v312 = vpop.permute.xlu0 %311
    %v314 = vsel %vm236, %v309, 0
    %v317 = vsel %vm236, %v312, 0
    %319 = vmatprep.subr.bf16.mxu0 0
    %320 = vmatpush1.bf16.xpose.msra.mxu0 0
    %321 = vmatprep.subr.bf16.mxu0 0
    %322 = vmatpush1.bf16.xpose.msra.mxu0 0
    %323 = vmatprep.subr.bf16.mxu0 0
    %324 = vmatpush1.bf16.xpose.msra.mxu0 0
    %325 = vmatprep.subr.bf16.mxu0 0
    %326 = vmatpush1.bf16.xpose.msra.mxu0 0
    %327 = vmatprep.subr.bf16.mxu0 0
    %328 = vmatpush1.bf16.xpose.msra.mxu0 0
    %329 = vmatprep.subr.bf16.mxu0 0
    %330 = vmatpush1.bf16.xpose.msra.mxu0 0
    %331 = vmatprep.subr.bf16.mxu0 0
    %332 = vmatpush1.bf16.xpose.msra.mxu0 0
    %333 = vmatprep.subr.bf16.mxu0 0
    %334 = vmatpush1.bf16.xpose.msra.mxu0 %v317
    %335 = vmatprep.subr.bf16.mxu0 0
    %336 = vmatpush2.bf16.xpose.msra.mxu0 0
    %337 = vmatprep.subr.bf16.mxu0 0
    %338 = vmatpush2.bf16.xpose.msra.mxu0 0
    %339 = vmatprep.subr.bf16.mxu0 0
    %340 = vmatpush2.bf16.xpose.msra.mxu0 0
    %341 = vmatprep.subr.bf16.mxu0 0
    %342 = vmatpush2.bf16.xpose.msra.mxu0 0
    %343 = vmatprep.subr.bf16.mxu0 0
    %344 = vmatpush2.bf16.xpose.msra.mxu0 0
    %345 = vmatprep.subr.bf16.mxu0 0
    %346 = vmatpush2.bf16.xpose.msra.mxu0 0
    %347 = vmatprep.subr.bf16.mxu0 0
    %348 = vmatpush2.bf16.xpose.msra.mxu0 0
    %349 = vmatprep.subr.bf16.mxu0 0
    %350 = vmatpush2.bf16.xpose.msra.mxu0 0
    %351 = vmatprep.mubr.bf16.mxu0 0
    %352 = vmatmul.mubr.bf16.gmra.mxu0 %v314
    %v353 = vpop.f32.mrf.mxu0
    %v354 = vadd.f32 0.0, %v353
    %v355 = vpop.f32.mrf.mxu0
    %v356 = vpop.f32.mrf.mxu0
    %v357 = vpop.f32.mrf.mxu0
    %358 = vdwg.mxu0
    %v359 = vmul.f32 %v354, 0.17677669
    %v360 = vsub.s32 %v51, %v53
    %v361 = vand.u32 %v360, 1
    %vm362 = vcmp.eq.s32.totalorder %v361, 0
    %vm363 = vcmp.le.s32.totalorder %v53, %v51
    %vm364 = vmand %vm362, %vm363
    %v365 = vsel %vm364, %v359, -1e+30
    %vm366 = vcmask 64512
    %v367 = vsel %vm366, %v365, -inf
    %368 = vmax.xlane.f32.xlu0 %v367
    %v369 = vpop.xlane.xlu0 %368
    %v370 = vsub.f32 %v365, %v369
    %v371 = vmul.f32 %v370, 1.442695
    %v372 = vpow.pop %v371
    %v373 = vsel %vm366, %v372, 0.0
    %374 = vadd.xlane.f32.xlu0 %v373
    %v375 = vpop.xlane.xlu0 %374
    %v376 = vrcp.pop %v375
    %v377 = vmul.f32 %v372, %v376
    %v378 = vpack.c.bf16 %v377, %v377
    %379 = vrot.lane.b32.xlu0 %v309, 64
    %v380 = vpop.permute.xlu0 %379
    %v382 = vsel %vm366, %v378, 0
    %vm384 = vcmask 1043456
    %v386 = vsel %vm384, %v380, 0
    %388 = vmatprep.subr.bf16.mxu0 0
    %389 = vmatpush1.bf16.msra.mxu0 0
    %390 = vmatprep.subr.bf16.mxu0 0
    %391 = vmatpush1.bf16.msra.mxu0 0
    %392 = vmatprep.subr.bf16.mxu0 0
    %393 = vmatpush1.bf16.msra.mxu0 0
    %394 = vmatprep.subr.bf16.mxu0 0
    %395 = vmatpush1.bf16.msra.mxu0 0
    %396 = vmatprep.subr.bf16.mxu0 0
    %397 = vmatpush1.bf16.msra.mxu0 0
    %398 = vmatprep.subr.bf16.mxu0 0
    %399 = vmatpush1.bf16.msra.mxu0 0
    %400 = vmatprep.subr.bf16.mxu0 0
    %401 = vmatpush1.bf16.msra.mxu0 0
    %402 = vmatprep.subr.bf16.mxu0 0
    %403 = vmatpush1.bf16.msra.mxu0 %v386
    %404 = vmatprep.subr.bf16.mxu0 0
    %405 = vmatpush2.bf16.msra.mxu0 0
    %406 = vmatprep.subr.bf16.mxu0 0
    %407 = vmatpush2.bf16.msra.mxu0 0
    %408 = vmatprep.subr.bf16.mxu0 0
    %409 = vmatpush2.bf16.msra.mxu0 0
    %410 = vmatprep.subr.bf16.mxu0 0
    %411 = vmatpush2.bf16.msra.mxu0 0
    %412 = vmatprep.subr.bf16.mxu0 0
    %413 = vmatpush2.bf16.msra.mxu0 0
    %414 = vmatprep.subr.bf16.mxu0 0
    %415 = vmatpush2.bf16.msra.mxu0 0
    %416 = vmatprep.subr.bf16.mxu0 0
    %417 = vmatpush2.bf16.msra.mxu0 0
    %418 = vmatprep.subr.bf16.mxu0 0
    %419 = vmatpush2.bf16.msra.mxu0 0
    %420 = vmatprep.mubr.bf16.mxu0 0
    %421 = vmatmul.mubr.bf16.gmra.mxu0 %v382
    %v422 = vpop.f32.mrf.mxu0
    %v423 = vadd.f32 0.0, %v422
    %v424 = vpop.f32.mrf.mxu0
    %v425 = vpop.f32.mrf.mxu0
    %v426 = vpop.f32.mrf.mxu0
    %427 = vdwg.mxu0
    %v428 = vsel %vm236, %v423, 1.0
    %v429 = vpack.c.bf16 %v428, %v428
    %v430 = vld [vmem:[%s4] sm:$0xf]
    %v431 = vld [vmem:[%s4 + $0x4] sm:$0xf]
    %v432 = vld [vmem:[%s4 + $0x8] sm:$0xf]
    %v433 = vld [vmem:[%s4 + $0xc] sm:$0xf]
    %v434 = vld [vmem:[%s4 + $0x10] sm:$0x1]
    %v440 = vunpack.c.l.b16 %v430
    %v441 = vunpack.c.l.b16 %v431
    %v442 = vunpack.c.l.b16 %v432
    %v443 = vunpack.c.l.b16 %v433
    %v444 = vunpack.c.l.b16 %v434
    %v445 = vpack.c.b16 %v441, %v440
    %v446 = vpack.c.b16 %v443, %v442
    %v447 = vpack.c.b16 %v444, %v444
    %v451 = vsel %vm259, %v429, 0
    %v454 = vand.u32 %v447, %v265
    %456 = vmatprep.subr.bf16.mxu0 0
    %457 = vmatpush1.bf16.msra.mxu0 0
    %458 = vmatprep.subr.bf16.mxu0 0
    %459 = vmatpush1.bf16.msra.mxu0 0
    %460 = vmatprep.subr.bf16.mxu0 0
    %461 = vmatpush1.bf16.msra.mxu0 0
    %462 = vmatprep.subr.bf16.mxu0 0
    %463 = vmatpush1.bf16.msra.mxu0 0
    %464 = vmatprep.subr.bf16.mxu0 0
    %465 = vmatpush1.bf16.msra.mxu0 0
    %466 = vmatprep.subr.bf16.mxu0 0
    %467 = vmatpush1.bf16.msra.mxu0 %v454
    %468 = vmatprep.subr.bf16.mxu0 0
    %469 = vmatpush1.bf16.msra.mxu0 %v446
    %470 = vmatprep.subr.bf16.mxu0 0
    %471 = vmatpush1.bf16.msra.mxu0 %v445
    %472 = vmatprep.subr.bf16.mxu0 0
    %473 = vmatpush2.bf16.msra.mxu0 0
    %474 = vmatprep.subr.bf16.mxu0 0
    %475 = vmatpush2.bf16.msra.mxu0 0
    %476 = vmatprep.subr.bf16.mxu0 0
    %477 = vmatpush2.bf16.msra.mxu0 0
    %478 = vmatprep.subr.bf16.mxu0 0
    %479 = vmatpush2.bf16.msra.mxu0 0
    %480 = vmatprep.subr.bf16.mxu0 0
    %481 = vmatpush2.bf16.msra.mxu0 0
    %482 = vmatprep.subr.bf16.mxu0 0
    %483 = vmatpush2.bf16.msra.mxu0 0
    %484 = vmatprep.subr.bf16.mxu0 0
    %485 = vmatpush2.bf16.msra.mxu0 0
    %486 = vmatprep.subr.bf16.mxu0 0
    %487 = vmatpush2.bf16.msra.mxu0 0
    %488 = vmatprep.mubr.bf16.mxu0 0
    %489 = vmatmul.mubr.bf16.gmra.mxu0 %v451
    %v490 = vpop.f32.mrf.mxu0
    %v491 = vadd.f32 0.0, %v490
    %v492 = vpop.f32.mrf.mxu0
    %v493 = vpop.f32.mrf.mxu0
    %v494 = vpop.f32.mrf.mxu0
    %495 = vdwg.mxu0
    %v496 = vadd.f32 %v233, %v491
    %v497 = vpack.c.bf16 %v496, %v496
    %v498 = vld [vmem:[%s5] sm:$0xf]
    %v499 = vld [vmem:[%s5 + $0x4] sm:$0xf]
    %v500 = vld [vmem:[%s5 + $0x8] sm:$0xf]
    %v501 = vld [vmem:[%s5 + $0xc] sm:$0xf]
    %s502 = scalar_lea.vmem %s5, 16
    %v503 = vld [vmem:[%s502] sm:$0xf]
    %v504 = vld [vmem:[%s502 + $0x4] sm:$0xf]
    %v505 = vld [vmem:[%s502 + $0x8] sm:$0xf]
    %v506 = vld [vmem:[%s502 + $0xc] sm:$0xf]
    %v508 = vrot.slane %v497, 1
    %v513 = vunpack.c.l.b16 %v503
    %v514 = vunpack.c.l.b16 %v504
    %v515 = vunpack.c.l.b16 %v505
    %v516 = vunpack.c.l.b16 %v506
    %v517 = vpack.c.b16 %v514, %v513
    %v518 = vpack.c.b16 %v516, %v515
    %v522 = vsel %vm236, %v508, 0
    %524 = vmatprep.subr.bf16.mxu0 0
    %525 = vmatpush1.bf16.msra.mxu0 0
    %526 = vmatprep.subr.bf16.mxu0 0
    %527 = vmatpush1.bf16.msra.mxu0 0
    %528 = vmatprep.subr.bf16.mxu0 0
    %529 = vmatpush1.bf16.msra.mxu0 0
    %530 = vmatprep.subr.bf16.mxu0 0
    %531 = vmatpush1.bf16.msra.mxu0 0
    %532 = vmatprep.subr.bf16.mxu0 0
    %533 = vmatpush1.bf16.msra.mxu0 0
    %534 = vmatprep.subr.bf16.mxu0 0
    %535 = vmatpush1.bf16.msra.mxu0 0
    %536 = vmatprep.subr.bf16.mxu0 0
    %537 = vmatpush1.bf16.msra.mxu0 %v518
    %538 = vmatprep.subr.bf16.mxu0 0
    %539 = vmatpush1.bf16.msra.mxu0 %v517
    %540 = vmatprep.subr.bf16.mxu0 0
    %541 = vmatpush2.bf16.msra.mxu0 0
    %542 = vmatprep.subr.bf16.mxu0 0
    %543 = vmatpush2.bf16.msra.mxu0 0
    %544 = vmatprep.subr.bf16.mxu0 0
    %545 = vmatpush2.bf16.msra.mxu0 0
    %546 = vmatprep.subr.bf16.mxu0 0
    %547 = vmatpush2.bf16.msra.mxu0 0
    %548 = vmatprep.subr.bf16.mxu0 0
    %549 = vmatpush2.bf16.msra.mxu0 0
    %550 = vmatprep.subr.bf16.mxu0 0
    %551 = vmatpush2.bf16.msra.mxu0 0
    %552 = vmatprep.subr.bf16.mxu0 0
    %553 = vmatpush2.bf16.msra.mxu0 0
    %554 = vmatprep.subr.bf16.mxu0 0
    %555 = vmatpush2.bf16.msra.mxu0 0
    %556 = vmatprep.mubr.bf16.mxu0 0
    %557 = vmatmul.mubr.bf16.gmra.mxu0 %v522
    %v558 = vpop.f32.mrf.mxu0
    %v559 = vadd.f32 0.0, %v558
    %v560 = vpop.f32.mrf.mxu0
    %v561 = vpop.f32.mrf.mxu0
    %v562 = vpop.f32.mrf.mxu0
    %563 = vdwg.mxu0
    %v568 = vunpack.c.l.b16 %v498
    %v569 = vunpack.c.l.b16 %v499
    %v570 = vunpack.c.l.b16 %v500
    %v571 = vunpack.c.l.b16 %v501
    %v572 = vpack.c.b16 %v569, %v568
    %v573 = vpack.c.b16 %v571, %v570
    %v577 = vsel %vm236, %v497, 0
    %579 = vmatprep.subr.bf16.mxu0 0
    %580 = vmatpush1.bf16.msra.mxu0 0
    %581 = vmatprep.subr.bf16.mxu0 0
    %582 = vmatpush1.bf16.msra.mxu0 0
    %583 = vmatprep.subr.bf16.mxu0 0
    %584 = vmatpush1.bf16.msra.mxu0 0
    %585 = vmatprep.subr.bf16.mxu0 0
    %586 = vmatpush1.bf16.msra.mxu0 0
    %587 = vmatprep.subr.bf16.mxu0 0
    %588 = vmatpush1.bf16.msra.mxu0 0
    %589 = vmatprep.subr.bf16.mxu0 0
    %590 = vmatpush1.bf16.msra.mxu0 0
    %591 = vmatprep.subr.bf16.mxu0 0
    %592 = vmatpush1.bf16.msra.mxu0 %v573
    %593 = vmatprep.subr.bf16.mxu0 0
    %594 = vmatpush1.bf16.msra.mxu0 %v572
    %595 = vmatprep.subr.bf16.mxu0 0
    %596 = vmatpush2.bf16.msra.mxu0 0
    %597 = vmatprep.subr.bf16.mxu0 0
    %598 = vmatpush2.bf16.msra.mxu0 0
    %599 = vmatprep.subr.bf16.mxu0 0
    %600 = vmatpush2.bf16.msra.mxu0 0
    %601 = vmatprep.subr.bf16.mxu0 0
    %602 = vmatpush2.bf16.msra.mxu0 0
    %603 = vmatprep.subr.bf16.mxu0 0
    %604 = vmatpush2.bf16.msra.mxu0 0
    %605 = vmatprep.subr.bf16.mxu0 0
    %606 = vmatpush2.bf16.msra.mxu0 0
    %607 = vmatprep.subr.bf16.mxu0 0
    %608 = vmatpush2.bf16.msra.mxu0 0
    %609 = vmatprep.subr.bf16.mxu0 0
    %610 = vmatpush2.bf16.msra.mxu0 0
    %611 = vmatprep.mubr.bf16.mxu0 0
    %612 = vmatmul.mubr.bf16.gmra.mxu0 %v577
    %v613 = vpop.f32.mrf.mxu0
    %v614 = vadd.f32 %v559, %v613
    %v615 = vpop.f32.mrf.mxu0
    %v616 = vpop.f32.mrf.mxu0
    %v617 = vpop.f32.mrf.mxu0
    %618 = vdwg.mxu0
    %s619 = scalar_lea.vmem %s5, 32
    %v620 = vld [vmem:[%s619] sm:$0xf]
    %v621 = vld [vmem:[%s619 + $0x4] sm:$0xf]
    %v622 = vld [vmem:[%s619 + $0x8] sm:$0xf]
    %v623 = vld [vmem:[%s619 + $0xc] sm:$0xf]
    %v624 = vrot.slane %v497, 2
    %v629 = vunpack.c.l.b16 %v620
    %v630 = vunpack.c.l.b16 %v621
    %v631 = vunpack.c.l.b16 %v622
    %v632 = vunpack.c.l.b16 %v623
    %v633 = vpack.c.b16 %v630, %v629
    %v634 = vpack.c.b16 %v632, %v631
    %v638 = vsel %vm236, %v624, 0
    %640 = vmatprep.subr.bf16.mxu0 0
    %641 = vmatpush1.bf16.msra.mxu0 0
    %642 = vmatprep.subr.bf16.mxu0 0
    %643 = vmatpush1.bf16.msra.mxu0 0
    %644 = vmatprep.subr.bf16.mxu0 0
    %645 = vmatpush1.bf16.msra.mxu0 0
    %646 = vmatprep.subr.bf16.mxu0 0
    %647 = vmatpush1.bf16.msra.mxu0 0
    %648 = vmatprep.subr.bf16.mxu0 0
    %649 = vmatpush1.bf16.msra.mxu0 0
    %650 = vmatprep.subr.bf16.mxu0 0
    %651 = vmatpush1.bf16.msra.mxu0 0
    %652 = vmatprep.subr.bf16.mxu0 0
    %653 = vmatpush1.bf16.msra.mxu0 %v634
    %654 = vmatprep.subr.bf16.mxu0 0
    %655 = vmatpush1.bf16.msra.mxu0 %v633
    %656 = vmatprep.subr.bf16.mxu0 0
    %657 = vmatpush2.bf16.msra.mxu0 0
    %658 = vmatprep.subr.bf16.mxu0 0
    %659 = vmatpush2.bf16.msra.mxu0 0
    %660 = vmatprep.subr.bf16.mxu0 0
    %661 = vmatpush2.bf16.msra.mxu0 0
    %662 = vmatprep.subr.bf16.mxu0 0
    %663 = vmatpush2.bf16.msra.mxu0 0
    %664 = vmatprep.subr.bf16.mxu0 0
    %665 = vmatpush2.bf16.msra.mxu0 0
    %666 = vmatprep.subr.bf16.mxu0 0
    %667 = vmatpush2.bf16.msra.mxu0 0
    %668 = vmatprep.subr.bf16.mxu0 0
    %669 = vmatpush2.bf16.msra.mxu0 0
    %670 = vmatprep.subr.bf16.mxu0 0
    %671 = vmatpush2.bf16.msra.mxu0 0
    %672 = vmatprep.mubr.bf16.mxu0 0
    %673 = vmatmul.mubr.bf16.gmra.mxu0 %v638
    %v674 = vpop.f32.mrf.mxu0
    %v675 = vadd.f32 0.0, %v674
    %v676 = vpop.f32.mrf.mxu0
    %v677 = vpop.f32.mrf.mxu0
    %v678 = vpop.f32.mrf.mxu0
    %679 = vdwg.mxu0
    %v680 = vadd.f32 %v614, %v675
    %s681 = scalar_lea.vmem %s5, 48
    %v682 = vld [vmem:[%s681] sm:$0xf]
    %v683 = vld [vmem:[%s681 + $0x4] sm:$0xf]
    %v684 = vld [vmem:[%s681 + $0x8] sm:$0xf]
    %v685 = vld [vmem:[%s681 + $0xc] sm:$0xf]
    %v686 = vrot.slane %v497, 3
    %v691 = vunpack.c.l.b16 %v682
    %v692 = vunpack.c.l.b16 %v683
    %v693 = vunpack.c.l.b16 %v684
    %v694 = vunpack.c.l.b16 %v685
    %v695 = vpack.c.b16 %v692, %v691
    %v696 = vpack.c.b16 %v694, %v693
    %v700 = vsel %vm236, %v686, 0
    %702 = vmatprep.subr.bf16.mxu0 0
    %703 = vmatpush1.bf16.msra.mxu0 0
    %704 = vmatprep.subr.bf16.mxu0 0
    %705 = vmatpush1.bf16.msra.mxu0 0
    %706 = vmatprep.subr.bf16.mxu0 0
    %707 = vmatpush1.bf16.msra.mxu0 0
    %708 = vmatprep.subr.bf16.mxu0 0
    %709 = vmatpush1.bf16.msra.mxu0 0
    %710 = vmatprep.subr.bf16.mxu0 0
    %711 = vmatpush1.bf16.msra.mxu0 0
    %712 = vmatprep.subr.bf16.mxu0 0
    %713 = vmatpush1.bf16.msra.mxu0 0
    %714 = vmatprep.subr.bf16.mxu0 0
    %715 = vmatpush1.bf16.msra.mxu0 %v696
    %716 = vmatprep.subr.bf16.mxu0 0
    %717 = vmatpush1.bf16.msra.mxu0 %v695
    %718 = vmatprep.subr.bf16.mxu0 0
    %719 = vmatpush2.bf16.msra.mxu0 0
    %720 = vmatprep.subr.bf16.mxu0 0
    %721 = vmatpush2.bf16.msra.mxu0 0
    %722 = vmatprep.subr.bf16.mxu0 0
    %723 = vmatpush2.bf16.msra.mxu0 0
    %724 = vmatprep.subr.bf16.mxu0 0
    %725 = vmatpush2.bf16.msra.mxu0 0
    %726 = vmatprep.subr.bf16.mxu0 0
    %727 = vmatpush2.bf16.msra.mxu0 0
    %728 = vmatprep.subr.bf16.mxu0 0
    %729 = vmatpush2.bf16.msra.mxu0 0
    %730 = vmatprep.subr.bf16.mxu0 0
    %731 = vmatpush2.bf16.msra.mxu0 0
    %732 = vmatprep.subr.bf16.mxu0 0
    %733 = vmatpush2.bf16.msra.mxu0 0
    %734 = vmatprep.mubr.bf16.mxu0 0
    %735 = vmatmul.mubr.bf16.gmra.mxu0 %v700
    %v736 = vpop.f32.mrf.mxu0
    %v737 = vadd.f32 0.0, %v736
    %v738 = vpop.f32.mrf.mxu0
    %v739 = vpop.f32.mrf.mxu0
    %v740 = vpop.f32.mrf.mxu0
    %741 = vdwg.mxu0
    %v742 = vadd.f32 %v680, %v737
    %vm743 = vcmp.lt.s32.totalorder %v53, 50
    %v744 = vsel %vm743, %v742, -1e+30
    %v745 = vsel %vm162, %v744, -inf
    %746 = vmax.xlane.f32.xlu0 %v745
    %v747 = vpop.xlane.xlu0 %746
    %v748 = vsub.f32 %v744, %v747
    %v749 = vmul.f32 %v748, 1.442695
    %v750 = vpow.pop %v749
    %v751 = vsel %vm162, %v750, 0.0
    %752 = vadd.xlane.f32.xlu0 %v751
    %v753 = vpop.xlane.xlu0 %752
    %v754 = vlog2.pop %v753
    %v755 = vmul.f32 %v754, 0.6931472
    %v756 = vadd.f32 %v747, %v755
    %v757 = vsub.f32 %v744, %v756
    %758 = vst [vmem:[#allocation7] sm:$0x3] %v757
    // Predicated region
    $region34: #{gpt_forward.1} parent=1 // pred_check
      _
    $region35: #{gpt_forward.1} parent=1 // pred_check_branch
      %760 = sbr.rel (0) target = $region37
    $region36: #{gpt_forward.1} parent=1 // pred_region
      %s762 = ssub.s32 32, 32
      %763 = vsyncadd [#allocation3], %s762
      %s765 = sshll.u32 [#allocation7], 4
      %s766 = int_to_ptr.vmem [resolvable:$true] %s765
      %768 = dma.vmem_to_hbm [thread:$0]  %s766, 32, %s6, [#allocation3]
    $region37: #{gpt_forward.1} parent=1 // pred_fallthru
      _
    // Predicated region
    $region38: #{gpt_forward.1} parent=1 // pred_check
      _
    $region39: #{gpt_forward.1} parent=1 // pred_check_branch
      %770 = sbr.rel (0) target = $region41
    $region40: #{gpt_forward.1} parent=1 // pred_region
      %771 = dma.done [#allocation3], 32
    $region41: #{gpt_forward.1} parent=1 // pred_fallthru
      _
    %772 = vsyncpa [#allocation3], 1
    %773 = vsyncpa [#allocation4], 1
    %774 = vsyncpa [#allocation6], 1

</llo_original>
